<compile_context>
chip_gen: v7x
topology: tpu7x:2x2x1
jax: 0.10.0
libtpu: 0.0.40
codegen_flags: <defaults>
</compile_context>

<pallas_src>
import jax
import jax.numpy as jnp
import numpy as np
from jax.experimental import pallas as pl
from jax.experimental.pallas import tpu as pltpu


# ---------------------------------------------------------------------------
# Parameter construction (deterministic, in-script)
# ---------------------------------------------------------------------------
def grouped_to_dense(w, G):
    """(Cout, Cin//G, 3, 3) grouped conv weight -> dense (3, 3, Cin, Cout)
    block-diagonal weight (zeros outside the group blocks)."""
    Cout, Cin_g, KH, KW = w.shape
    Cout_g = Cout // G
    Cin = Cin_g * G
    dense = jnp.zeros((KH, KW, Cin, Cout), w.dtype)
    for g in range(G):
        blk = jnp.transpose(w[g * Cout_g:(g + 1) * Cout_g], (2, 3, 1, 0))
        dense = dense.at[:, :,
                         g * Cin_g:(g + 1) * Cin_g,
                         g * Cout_g:(g + 1) * Cout_g].set(blk)
    return dense


def init_params(key, Cin, Cout, M, G, r, L):
    d = max(Cin // r, L)
    ks = jax.random.split(key, 10)
    eps = 1e-5

    # Branch conv weights (grouped, no bias): (M, Cout, Cin//G, 3, 3)
    w_grouped = 0.2 * jax.random.normal(ks[0], (M, Cout, Cin // G, 3, 3),
                                        jnp.float32)
    w_dense = jnp.stack([grouped_to_dense(w_grouped[m], G) for m in range(M)])

    # Branch BatchNorm (inference fold): scale/bias per branch & channel.
    gamma = 1.0 + 0.1 * jax.random.normal(ks[1], (M, Cout), jnp.float32)
    beta = 0.05 * jax.random.normal(ks[2], (M, Cout), jnp.float32)
    rmean = 0.1 * jax.random.normal(ks[3], (M, Cout), jnp.float32)
    rvar = 0.5 + 0.5 * jnp.abs(jax.random.normal(ks[4], (M, Cout), jnp.float32))
    bn_scale = gamma / jnp.sqrt(rvar + eps)
    bn_bias = beta - rmean * bn_scale

    # fc1: 1x1 conv Cout -> d (no bias) + BN + ReLU
    fc1_w = 0.2 * jax.random.normal(ks[5], (d, Cout), jnp.float32)
    gamma1 = 1.0 + 0.1 * jax.random.normal(ks[6], (d,), jnp.float32)
    beta1 = 0.05 * jax.random.normal(ks[7], (d,), jnp.float32)
    rmean1 = 0.1 * jax.random.normal(ks[8], (d,), jnp.float32)
    rvar1 = 0.5 + 0.5 * jnp.abs(jax.random.normal(ks[9], (d,), jnp.float32))
    bn1_scale = (gamma1 / jnp.sqrt(rvar1 + eps)).reshape(1, d)
    bn1_bias = (beta1 - rmean1 * gamma1 / jnp.sqrt(rvar1 + eps)).reshape(1, d)

    # fc2: 1x1 conv d -> M*Cout (no bias)
    fc2_w = 0.2 * jax.random.normal(jax.random.fold_in(key, 99),
                                    (M * Cout, d), jnp.float32)
    fc2_t = jnp.transpose(fc2_w.reshape(M, Cout, d), (0, 2, 1))  # (M, d, Cout)

    return dict(w_grouped=w_grouped, w_dense=w_dense,
                bn_scale=bn_scale, bn_bias=bn_bias,
                fc1_w=fc1_w, bn1_scale=bn1_scale, bn1_bias=bn1_bias,
                fc2_w=fc2_w, fc2_t=fc2_t)


def pack_for_kernel(params, *, M, H, W, Cin, Cout):
    """Build the fused / banded operands consumed by the Pallas kernel."""
    d = params["fc1_w"].shape[0]

    # Fold BN scale into the dense conv weights, then build one banded weight
    # per branch with shape (3*W*Cin, W*Cout): the three kh taps are stacked
    # along K (fed by three vertically shifted row windows concatenated along
    # lanes), and the three horizontal taps form a band over the W*Cin rows.
    # Out-of-range horizontal taps are simply omitted, which bakes the
    # horizontal zero-padding into the weight so the kernel never pads lanes
    # (K = W*Cin stays exactly 128-lane aligned).
    w_dense = np.asarray(params["w_dense"], np.float32)      # (M,3,3,Cin,Cout)
    bn_scale = np.asarray(params["bn_scale"], np.float32)    # (M, Cout)
    w_sc = w_dense * bn_scale[:, None, None, None, :]

    band = np.zeros((M, 3 * W * Cin, W * Cout), np.float32)
    for m in range(M):
        dil = m + 1
        for kh in range(3):
            for kw in range(3):
                for w in range(W):
                    wsrc = w + (kw - 1) * dil
                    if 0 <= wsrc < W:
                        band[m,
                             kh * W * Cin + wsrc * Cin:
                             kh * W * Cin + (wsrc + 1) * Cin,
                             w * Cout:(w + 1) * Cout] += w_sc[m, kh, kw]
    # NOTE: the band scales ~W x vs. the raw conv weights; at production W
    # switch to a shifted-lane (pltpu.roll / im2col) formulation and tile W
    # as a grid axis (matters first on v7x's smaller VMEM).
    w_band = jnp.asarray(band, jnp.bfloat16)                  # bf16 MXU operand

    # BN bias tiled into the fused (W*Cout) lane layout.
    bn_bias_f = jnp.tile(params["bn_bias"], (1, W))           # (M, W*Cout)

    # GAP (mean over H*W) folded into fc1: (W*Cout, d), bf16 MXU operand.
    gap_fc1 = (jnp.tile(jnp.transpose(params["fc1_w"]), (W, 1))
               / float(H * W)).astype(jnp.bfloat16)

    # fc2 pre-tiled W-wide so logits land directly in the fused layout:
    # column m*W*Cout + w*Cout + co == head m, channel co (repeated over w).
    fc2_np = np.asarray(params["fc2_w"], np.float32).reshape(M, Cout, d)
    fc2_tiled = np.transpose(fc2_np, (2, 0, 1))               # (d, M, Cout)
    fc2_tiled = np.tile(fc2_tiled[:, :, None, :], (1, 1, W, 1))
    fc2_tiled = jnp.asarray(fc2_tiled.reshape(d, M * W * Cout), jnp.bfloat16)

    return dict(w_band=w_band, bn_bias_f=bn_bias_f, gap_fc1=gap_fc1,
                bn1_scale=params["bn1_scale"], bn1_bias=params["bn1_bias"],
                fc2_tiled=fc2_tiled)


# ---------------------------------------------------------------------------
# Pallas kernel
# ---------------------------------------------------------------------------
def make_skconv_kernel(B, H, W, Cin, Cout, M):
    WCi = W * Cin
    WCo = W * Cout

    def kernel(x_ref, band_ref, bnb_ref, gapfc1_ref, bn1s_ref, bn1b_ref,
               fc2_ref, out_ref):
        x = x_ref[...]                                        # (B, H, WCi) f32

        # Vertically shifted, batch-stacked row windows.  Horizontal padding
        # lives in the band weights, so lanes stay exactly W*Cin = 128 wide.
        # One bf16 cast per distinct shift; shift 0 is shared by all branches.
        shifts = sorted({s for m in range(M) for s in (-(m + 1), 0, m + 1)})
        wins = {}
        for s in shifts:
            pieces = []
            for b in range(B):
                img = x[b]                                    # (H, WCi)
                if s == 0:
                    wb = img
                elif s > 0:
                    wb = jnp.concatenate(
                        [img[s:, :], jnp.zeros((s, WCi), img.dtype)], axis=0)
                else:
                    wb = jnp.concatenate(
                        [jnp.zeros((-s, WCi), img.dtype), img[:H + s, :]],
                        axis=0)
                pieces.append(wb)
            wins[s] = jnp.concatenate(pieces, axis=0).astype(jnp.bfloat16)

        # --- M dilated grouped-conv branches: ONE lane-dense matmul each ---
        feats = []
        for m in range(M):
            dil = m + 1
            lhs = jnp.concatenate([wins[-dil], wins[0], wins[dil]], axis=-1)
            conv = jnp.dot(lhs, band_ref[m],
                           preferred_element_type=jnp.float32)  # (B*H, WCo)
            # BN bias (scale already folded into the weights) + ReLU.
            feats.append(jnp.maximum(conv + bnb_ref[m:m + 1, :], 0.0))

        # --- U = sum of branches; GAP + fc1 fused into one matmul ---
        U = feats[0]
        for m in range(1, M):
            U = U + feats[m]
        u_rows = [jnp.sum(U[b * H:(b + 1) * H, :], axis=0, keepdims=True)
                  for b in range(B)]
        u_sum = jnp.concatenate(u_rows, axis=0)               # (B, WCo)
        z = jnp.dot(u_sum.astype(jnp.bfloat16), gapfc1_ref[...],
                    preferred_element_type=jnp.float32)       # (B, d)
        z = jnp.maximum(z * bn1s_ref[...] + bn1b_ref[...], 0.0)

        # --- fc2 (all M heads, W-tiled) + softmax over branches, full-lane ---
        logits = jnp.dot(z.astype(jnp.bfloat16), fc2_ref[...],
                         preferred_element_type=jnp.float32)  # (B, M*WCo)
        ls = [logits[:, m * WCo:(m + 1) * WCo] for m in range(M)]
        mx = ls[0]
        for m in range(1, M):
            mx = jnp.maximum(mx, ls[m])
        es = [jnp.exp(l - mx) for l in ls]
        den = es[0]
        for m in range(1, M):
            den = den + es[m]
        inv = pl.reciprocal(den, approx=True)                 # (B, WCo)

        # --- attention-weighted sum of branch features (fused layout) ---
        V = feats[0].reshape(B, H, WCo) * (es[0] * inv).reshape(B, 1, WCo)
        for m in range(1, M):
            V = V + (feats[m].reshape(B, H, WCo)
                     * (es[m] * inv).reshape(B, 1, WCo))
        out_ref[...] = V.astype(out_ref.dtype)                # lane-dense vst

    return kernel


def skconv_pallas(x_nhwc, kparams, *, M):
    """x_nhwc: (B, H, W, Cin) float32 -> (B, H, W, Cout) float32."""
    B, H, W, Cin = x_nhwc.shape
    WCo = kparams["bn_bias_f"].shape[1]
    Cout = WCo // W
    d = kparams["gap_fc1"].shape[1]
    WCi = W * Cin

    x_fused = x_nhwc.reshape(B, H, WCi)        # free reshape, lane-dense

    kernel = make_skconv_kernel(B, H, W, Cin, Cout, M)

    out = pl.pallas_call(
        kernel,
        out_shape=jax.ShapeDtypeStruct((B, H, WCo), x_nhwc.dtype),
        grid_spec=pltpu.PrefetchScalarGridSpec(
            num_scalar_prefetch=0,
            grid=(1,),                          # whole batch in one grid step
            in_specs=[
                pl.BlockSpec((B, H, WCi), lambda i: (0, 0, 0)),
                pl.BlockSpec((M, 3 * WCi, WCo), lambda i: (0, 0, 0)),
                pl.BlockSpec((M, WCo), lambda i: (0, 0)),
                pl.BlockSpec((WCo, d), lambda i: (0, 0)),
                pl.BlockSpec((1, d), lambda i: (0, 0)),
                pl.BlockSpec((1, d), lambda i: (0, 0)),
                pl.BlockSpec((d, M * WCo), lambda i: (0, 0)),
            ],
            out_specs=pl.BlockSpec((B, H, WCo), lambda i: (0, 0, 0)),
        ),
        compiler_params=pltpu.CompilerParams(
            dimension_semantics=("arbitrary",)),
    )(x_fused, kparams["w_band"], kparams["bn_bias_f"], kparams["gap_fc1"],
      kparams["bn1_scale"], kparams["bn1_bias"], kparams["fc2_tiled"])

    return out.reshape(B, H, W, Cout)          # free reshape back to NHWC


# ---------------------------------------------------------------------------
# Pure-JAX reference (NCHW, mirrors the PyTorch forward, eval-mode BN)
# ---------------------------------------------------------------------------
def skconv_ref(x, p, M, G):
    outs = []
    for m in range(M):
        dil = m + 1
        y = jax.lax.conv_general_dilated(
            x, p["w_grouped"][m], window_strides=(1, 1),
            padding=((dil, dil), (dil, dil)), rhs_dilation=(dil, dil),
            feature_group_count=G,
            dimension_numbers=("NCHW", "OIHW", "NCHW"),
            precision=jax.lax.Precision.HIGHEST)
        y = (y * p["bn_scale"][m][None, :, None, None]
             + p["bn_bias"][m][None, :, None, None])
        outs.append(jnp.maximum(y, 0.0))
    U = outs[0]
    for m in range(1, M):
        U = U + outs[m]
    s = jnp.mean(U, axis=(2, 3))                              # (B, Cout)
    z = jnp.einsum("bc,dc->bd", s, p["fc1_w"],
                   precision=jax.lax.Precision.HIGHEST)       # (B, d)
    z = jnp.maximum(z * p["bn1_scale"] + p["bn1_bias"], 0.0)
    logits = jnp.einsum("bd,mdc->bmc", z, p["fc2_t"],
                        precision=jax.lax.Precision.HIGHEST)  # (B, M, Cout)
    a = jax.nn.softmax(logits, axis=1)
    V = jnp.zeros_like(outs[0])
    for m in range(M):
        V = V + outs[m] * a[:, m][:, :, None, None]
    return V


# ---------------------------------------------------------------------------
if __name__ == "__main__":
    key = jax.random.PRNGKey(0)
    B, Cin, H, W = 2, 8, 16, 16
    Cout, M, G, r, L = 8, 2, 4, 2, 8   # d = max(Cin // r, L) = 8

    kx, kp = jax.random.split(key)
    x = jax.random.normal(kx, (B, Cin, H, W), jnp.float32)   # NCHW (PyTorch)
    params = init_params(kp, Cin, Cout, M, G, r, L)
    kparams = pack_for_kernel(params, M=M, H=H, W=W, Cin=Cin, Cout=Cout)

    # The kernel is NHWC; the one-time NCHW<->NHWC adaptation for the PyTorch
    # interface lives outside the hot path.
    x_nhwc = jnp.transpose(x, (0, 2, 3, 1))
    out_nhwc = skconv_pallas(x_nhwc, kparams, M=M)
    out_nhwc = jax.block_until_ready(out_nhwc)
    out = jnp.transpose(out_nhwc, (0, 3, 1, 2))              # back to NCHW

    ref = skconv_ref(x, params, M, G)
    # Tolerance relaxed vs a pure-f32 version: conv / fc1 / fc2 MXU operands
    # are bf16 (BN scale folded into the bf16 weights) and the softmax
    # denominator uses the approximate EUP reciprocal.
    np.testing.assert_allclose(np.asarray(out), np.asarray(ref),
                               atol=2e-2, rtol=2e-2)
    print("KERNEL_OK")
</pallas_src>

<mosaic_0001>
module attributes {stable_mosaic.version = 11 : i64} {
  func.func @kernel(%arg0: i32, %arg1: memref<2x16x128xf32, #tpu.memory_space<vmem>>, %arg2: memref<2x384x128xbf16, #tpu.memory_space<vmem>>, %arg3: memref<2x128xf32, #tpu.memory_space<vmem>>, %arg4: memref<128x8xbf16, #tpu.memory_space<vmem>>, %arg5: memref<1x8xf32, #tpu.memory_space<vmem>>, %arg6: memref<1x8xf32, #tpu.memory_space<vmem>>, %arg7: memref<8x256xbf16, #tpu.memory_space<vmem>>, %arg8: memref<2x16x128xf32, #tpu.memory_space<vmem>>) attributes {dimension_semantics = [#tpu.dimension_semantics<arbitrary>], iteration_bounds = array<i64: 1>, scalar_prefetch = 0 : i64, scratch_operands = 0 : i64, tpu.core_type = #tpu.core_type<tc>, window_params = [{pipeline_mode = #tpu.pipeline_mode<synchronous>, transform_indices = @transform_0, window_bounds = array<i64: 2, 16, 128>}, {pipeline_mode = #tpu.pipeline_mode<synchronous>, transform_indices = @transform_1, window_bounds = array<i64: 2, 384, 128>}, {pipeline_mode = #tpu.pipeline_mode<synchronous>, transform_indices = @transform_2, window_bounds = array<i64: 2, 128>}, {pipeline_mode = #tpu.pipeline_mode<synchronous>, transform_indices = @transform_3, window_bounds = array<i64: 128, 8>}, {pipeline_mode = #tpu.pipeline_mode<synchronous>, transform_indices = @transform_4, window_bounds = array<i64: 1, 8>}, {pipeline_mode = #tpu.pipeline_mode<synchronous>, transform_indices = @transform_5, window_bounds = array<i64: 1, 8>}, {pipeline_mode = #tpu.pipeline_mode<synchronous>, transform_indices = @transform_6, window_bounds = array<i64: 8, 256>}, {pipeline_mode = #tpu.pipeline_mode<synchronous>, transform_indices = @transform_7, window_bounds = array<i64: 2, 16, 128>}]} {
    %c0 = arith.constant 0 : index
    %c0_0 = arith.constant 0 : index
    %c0_1 = arith.constant 0 : index
    %0 = vector.load %arg1[%c0, %c0_0, %c0_1] : memref<2x16x128xf32, #tpu.memory_space<vmem>>, vector<2x16x128xf32>
    %1 = vector.extract_strided_slice %0 {offsets = [0, 0, 0], sizes = [1, 16, 128], strides = [1, 1, 1]} : vector<2x16x128xf32> to vector<1x16x128xf32>
    %2 = vector.shape_cast %1 : vector<1x16x128xf32> to vector<16x128xf32>
    %cst = arith.constant 0.000000e+00 : f32
    %3 = vector.broadcast %cst : f32 to vector<2x128xf32>
    %4 = vector.extract_strided_slice %2 {offsets = [0, 0], sizes = [14, 128], strides = [1, 1]} : vector<16x128xf32> to vector<14x128xf32>
    %5 = tpu.concatenate %3, %4 in 0 : vector<2x128xf32>, vector<14x128xf32> -> vector<16x128xf32>
    %6 = vector.extract_strided_slice %0 {offsets = [1, 0, 0], sizes = [1, 16, 128], strides = [1, 1, 1]} : vector<2x16x128xf32> to vector<1x16x128xf32>
    %7 = vector.shape_cast %6 : vector<1x16x128xf32> to vector<16x128xf32>
    %cst_2 = arith.constant 0.000000e+00 : f32
    %8 = vector.broadcast %cst_2 : f32 to vector<2x128xf32>
    %9 = vector.extract_strided_slice %7 {offsets = [0, 0], sizes = [14, 128], strides = [1, 1]} : vector<16x128xf32> to vector<14x128xf32>
    %10 = tpu.concatenate %8, %9 in 0 : vector<2x128xf32>, vector<14x128xf32> -> vector<16x128xf32>
    %11 = tpu.concatenate %5, %10 in 0 : vector<16x128xf32>, vector<16x128xf32> -> vector<32x128xf32>
    %12 = arith.truncf %11 : vector<32x128xf32> to vector<32x128xbf16>
    %13 = vector.extract_strided_slice %0 {offsets = [0, 0, 0], sizes = [1, 16, 128], strides = [1, 1, 1]} : vector<2x16x128xf32> to vector<1x16x128xf32>
    %14 = vector.shape_cast %13 : vector<1x16x128xf32> to vector<16x128xf32>
    %cst_3 = arith.constant 0.000000e+00 : f32
    %15 = vector.broadcast %cst_3 : f32 to vector<1x128xf32>
    %16 = vector.extract_strided_slice %14 {offsets = [0, 0], sizes = [15, 128], strides = [1, 1]} : vector<16x128xf32> to vector<15x128xf32>
    %17 = tpu.concatenate %15, %16 in 0 : vector<1x128xf32>, vector<15x128xf32> -> vector<16x128xf32>
    %18 = vector.extract_strided_slice %0 {offsets = [1, 0, 0], sizes = [1, 16, 128], strides = [1, 1, 1]} : vector<2x16x128xf32> to vector<1x16x128xf32>
    %19 = vector.shape_cast %18 : vector<1x16x128xf32> to vector<16x128xf32>
    %cst_4 = arith.constant 0.000000e+00 : f32
    %20 = vector.broadcast %cst_4 : f32 to vector<1x128xf32>
    %21 = vector.extract_strided_slice %19 {offsets = [0, 0], sizes = [15, 128], strides = [1, 1]} : vector<16x128xf32> to vector<15x128xf32>
    %22 = tpu.concatenate %20, %21 in 0 : vector<1x128xf32>, vector<15x128xf32> -> vector<16x128xf32>
    %23 = tpu.concatenate %17, %22 in 0 : vector<16x128xf32>, vector<16x128xf32> -> vector<32x128xf32>
    %24 = arith.truncf %23 : vector<32x128xf32> to vector<32x128xbf16>
    %25 = vector.extract_strided_slice %0 {offsets = [0, 0, 0], sizes = [1, 16, 128], strides = [1, 1, 1]} : vector<2x16x128xf32> to vector<1x16x128xf32>
    %26 = vector.shape_cast %25 : vector<1x16x128xf32> to vector<16x128xf32>
    %27 = vector.extract_strided_slice %0 {offsets = [1, 0, 0], sizes = [1, 16, 128], strides = [1, 1, 1]} : vector<2x16x128xf32> to vector<1x16x128xf32>
    %28 = vector.shape_cast %27 : vector<1x16x128xf32> to vector<16x128xf32>
    %29 = tpu.concatenate %26, %28 in 0 : vector<16x128xf32>, vector<16x128xf32> -> vector<32x128xf32>
    %30 = arith.truncf %29 : vector<32x128xf32> to vector<32x128xbf16>
    %31 = vector.extract_strided_slice %0 {offsets = [0, 0, 0], sizes = [1, 16, 128], strides = [1, 1, 1]} : vector<2x16x128xf32> to vector<1x16x128xf32>
    %32 = vector.shape_cast %31 : vector<1x16x128xf32> to vector<16x128xf32>
    %33 = vector.extract_strided_slice %32 {offsets = [1, 0], sizes = [15, 128], strides = [1, 1]} : vector<16x128xf32> to vector<15x128xf32>
    %cst_5 = arith.constant 0.000000e+00 : f32
    %34 = vector.broadcast %cst_5 : f32 to vector<1x128xf32>
    %35 = tpu.concatenate %33, %34 in 0 : vector<15x128xf32>, vector<1x128xf32> -> vector<16x128xf32>
    %36 = vector.extract_strided_slice %0 {offsets = [1, 0, 0], sizes = [1, 16, 128], strides = [1, 1, 1]} : vector<2x16x128xf32> to vector<1x16x128xf32>
    %37 = vector.shape_cast %36 : vector<1x16x128xf32> to vector<16x128xf32>
    %38 = vector.extract_strided_slice %37 {offsets = [1, 0], sizes = [15, 128], strides = [1, 1]} : vector<16x128xf32> to vector<15x128xf32>
    %cst_6 = arith.constant 0.000000e+00 : f32
    %39 = vector.broadcast %cst_6 : f32 to vector<1x128xf32>
    %40 = tpu.concatenate %38, %39 in 0 : vector<15x128xf32>, vector<1x128xf32> -> vector<16x128xf32>
    %41 = tpu.concatenate %35, %40 in 0 : vector<16x128xf32>, vector<16x128xf32> -> vector<32x128xf32>
    %42 = arith.truncf %41 : vector<32x128xf32> to vector<32x128xbf16>
    %43 = vector.extract_strided_slice %0 {offsets = [0, 0, 0], sizes = [1, 16, 128], strides = [1, 1, 1]} : vector<2x16x128xf32> to vector<1x16x128xf32>
    %44 = vector.shape_cast %43 : vector<1x16x128xf32> to vector<16x128xf32>
    %45 = vector.extract_strided_slice %44 {offsets = [2, 0], sizes = [14, 128], strides = [1, 1]} : vector<16x128xf32> to vector<14x128xf32>
    %cst_7 = arith.constant 0.000000e+00 : f32
    %46 = vector.broadcast %cst_7 : f32 to vector<2x128xf32>
    %47 = tpu.concatenate %45, %46 in 0 : vector<14x128xf32>, vector<2x128xf32> -> vector<16x128xf32>
    %48 = vector.extract_strided_slice %0 {offsets = [1, 0, 0], sizes = [1, 16, 128], strides = [1, 1, 1]} : vector<2x16x128xf32> to vector<1x16x128xf32>
    %49 = vector.shape_cast %48 : vector<1x16x128xf32> to vector<16x128xf32>
    %50 = vector.extract_strided_slice %49 {offsets = [2, 0], sizes = [14, 128], strides = [1, 1]} : vector<16x128xf32> to vector<14x128xf32>
    %cst_8 = arith.constant 0.000000e+00 : f32
    %51 = vector.broadcast %cst_8 : f32 to vector<2x128xf32>
    %52 = tpu.concatenate %50, %51 in 0 : vector<14x128xf32>, vector<2x128xf32> -> vector<16x128xf32>
    %53 = tpu.concatenate %47, %52 in 0 : vector<16x128xf32>, vector<16x128xf32> -> vector<32x128xf32>
    %54 = arith.truncf %53 : vector<32x128xf32> to vector<32x128xbf16>
    %55 = tpu.concatenate %24, %30, %42 in 1 : vector<32x128xbf16>, vector<32x128xbf16>, vector<32x128xbf16> -> vector<32x384xbf16>
    %c0_9 = arith.constant 0 : index
    %c0_10 = arith.constant 0 : index
    %c0_11 = arith.constant 0 : index
    %56 = vector.load %arg2[%c0_9, %c0_10, %c0_11] : memref<2x384x128xbf16, #tpu.memory_space<vmem>>, vector<1x384x128xbf16>
    %57 = vector.shape_cast %56 : vector<1x384x128xbf16> to vector<384x128xbf16>
    %cst_12 = arith.constant dense<0.000000e+00> : vector<32x128xf32>
    %58 = tpu.matmul %55, %57, %cst_12 {dimension_numbers = #tpu.dot_dimension_numbers<[1], [0], [0], [1], [0, 0, 1, 1], [], []>} : vector<32x384xbf16>, vector<384x128xbf16>, vector<32x128xf32> -> vector<32x128xf32>
    %c0_13 = arith.constant 0 : index
    %c0_14 = arith.constant 0 : index
    %59 = vector.load %arg3[%c0_13, %c0_14] : memref<2x128xf32, #tpu.memory_space<vmem>>, vector<1x128xf32>
    %60 = vector.broadcast %59 : vector<1x128xf32> to vector<32x128xf32>
    %61 = arith.addf %58, %60 : vector<32x128xf32>
    %cst_15 = arith.constant 0.000000e+00 : f32
    %62 = vector.broadcast %cst_15 : f32 to vector<32x128xf32>
    %63 = arith.maximumf %61, %62 : vector<32x128xf32>
    %64 = tpu.concatenate %12, %30, %54 in 1 : vector<32x128xbf16>, vector<32x128xbf16>, vector<32x128xbf16> -> vector<32x384xbf16>
    %c1 = arith.constant 1 : index
    %c0_16 = arith.constant 0 : index
    %c0_17 = arith.constant 0 : index
    %65 = vector.load %arg2[%c1, %c0_16, %c0_17] : memref<2x384x128xbf16, #tpu.memory_space<vmem>>, vector<1x384x128xbf16>
    %66 = vector.shape_cast %65 : vector<1x384x128xbf16> to vector<384x128xbf16>
    %cst_18 = arith.constant dense<0.000000e+00> : vector<32x128xf32>
    %67 = tpu.matmul %64, %66, %cst_18 {dimension_numbers = #tpu.dot_dimension_numbers<[1], [0], [0], [1], [0, 0, 1, 1], [], []>} : vector<32x384xbf16>, vector<384x128xbf16>, vector<32x128xf32> -> vector<32x128xf32>
    %c1_19 = arith.constant 1 : index
    %c0_20 = arith.constant 0 : index
    %68 = vector.load %arg3[%c1_19, %c0_20] : memref<2x128xf32, #tpu.memory_space<vmem>>, vector<1x128xf32>
    %69 = vector.broadcast %68 : vector<1x128xf32> to vector<32x128xf32>
    %70 = arith.addf %67, %69 : vector<32x128xf32>
    %cst_21 = arith.constant 0.000000e+00 : f32
    %71 = vector.broadcast %cst_21 : f32 to vector<32x128xf32>
    %72 = arith.maximumf %70, %71 : vector<32x128xf32>
    %73 = arith.addf %63, %72 : vector<32x128xf32>
    %74 = vector.extract_strided_slice %73 {offsets = [0, 0], sizes = [16, 128], strides = [1, 1]} : vector<32x128xf32> to vector<16x128xf32>
    %cst_22 = arith.constant dense<0.000000e+00> : vector<128xf32>
    %75 = vector.multi_reduction <add>, %74, %cst_22 [0] : vector<16x128xf32> to vector<128xf32>
    %76 = vector.shape_cast %75 : vector<128xf32> to vector<1x128xf32>
    %77 = vector.extract_strided_slice %73 {offsets = [16, 0], sizes = [16, 128], strides = [1, 1]} : vector<32x128xf32> to vector<16x128xf32>
    %cst_23 = arith.constant dense<0.000000e+00> : vector<128xf32>
    %78 = vector.multi_reduction <add>, %77, %cst_23 [0] : vector<16x128xf32> to vector<128xf32>
    %79 = vector.shape_cast %78 : vector<128xf32> to vector<1x128xf32>
    %80 = tpu.concatenate %76, %79 in 0 : vector<1x128xf32>, vector<1x128xf32> -> vector<2x128xf32>
    %81 = arith.truncf %80 : vector<2x128xf32> to vector<2x128xbf16>
    %c0_24 = arith.constant 0 : index
    %c0_25 = arith.constant 0 : index
    %82 = vector.load %arg4[%c0_24, %c0_25] : memref<128x8xbf16, #tpu.memory_space<vmem>>, vector<128x8xbf16>
    %cst_26 = arith.constant dense<0.000000e+00> : vector<2x8xf32>
    %83 = tpu.matmul %81, %82, %cst_26 {dimension_numbers = #tpu.dot_dimension_numbers<[1], [0], [0], [1], [0, 0, 1, 1], [], []>} : vector<2x128xbf16>, vector<128x8xbf16>, vector<2x8xf32> -> vector<2x8xf32>
    %c0_27 = arith.constant 0 : index
    %c0_28 = arith.constant 0 : index
    %84 = vector.load %arg5[%c0_27, %c0_28] : memref<1x8xf32, #tpu.memory_space<vmem>>, vector<1x8xf32>
    %85 = vector.broadcast %84 : vector<1x8xf32> to vector<2x8xf32>
    %86 = arith.mulf %83, %85 : vector<2x8xf32>
    %c0_29 = arith.constant 0 : index
    %c0_30 = arith.constant 0 : index
    %87 = vector.load %arg6[%c0_29, %c0_30] : memref<1x8xf32, #tpu.memory_space<vmem>>, vector<1x8xf32>
    %88 = vector.broadcast %87 : vector<1x8xf32> to vector<2x8xf32>
    %89 = arith.addf %86, %88 : vector<2x8xf32>
    %cst_31 = arith.constant 0.000000e+00 : f32
    %90 = vector.broadcast %cst_31 : f32 to vector<2x8xf32>
    %91 = arith.maximumf %89, %90 : vector<2x8xf32>
    %92 = arith.truncf %91 : vector<2x8xf32> to vector<2x8xbf16>
    %c0_32 = arith.constant 0 : index
    %c0_33 = arith.constant 0 : index
    %93 = vector.load %arg7[%c0_32, %c0_33] : memref<8x256xbf16, #tpu.memory_space<vmem>>, vector<8x256xbf16>
    %cst_34 = arith.constant dense<0.000000e+00> : vector<2x256xf32>
    %94 = tpu.matmul %92, %93, %cst_34 {dimension_numbers = #tpu.dot_dimension_numbers<[1], [0], [0], [1], [0, 0, 1, 1], [], []>} : vector<2x8xbf16>, vector<8x256xbf16>, vector<2x256xf32> -> vector<2x256xf32>
    %95 = vector.extract_strided_slice %94 {offsets = [0, 0], sizes = [2, 128], strides = [1, 1]} : vector<2x256xf32> to vector<2x128xf32>
    %96 = vector.extract_strided_slice %94 {offsets = [0, 128], sizes = [2, 128], strides = [1, 1]} : vector<2x256xf32> to vector<2x128xf32>
    %97 = arith.maximumf %95, %96 : vector<2x128xf32>
    %98 = arith.subf %95, %97 : vector<2x128xf32>
    %99 = math.exp %98 : vector<2x128xf32>
    %100 = arith.subf %96, %97 : vector<2x128xf32>
    %101 = math.exp %100 : vector<2x128xf32>
    %102 = arith.addf %99, %101 : vector<2x128xf32>
    %103 = tpu.reciprocal %102 {approx = true} : vector<2x128xf32> -> vector<2x128xf32>
    %104 = vector.shape_cast %63 : vector<32x128xf32> to vector<2x16x128xf32>
    %105 = arith.mulf %99, %103 : vector<2x128xf32>
    %106 = vector.shape_cast %105 : vector<2x128xf32> to vector<2x1x128xf32>
    %107 = vector.broadcast %106 : vector<2x1x128xf32> to vector<2x16x128xf32>
    %108 = arith.mulf %104, %107 : vector<2x16x128xf32>
    %109 = vector.shape_cast %72 : vector<32x128xf32> to vector<2x16x128xf32>
    %110 = arith.mulf %101, %103 : vector<2x128xf32>
    %111 = vector.shape_cast %110 : vector<2x128xf32> to vector<2x1x128xf32>
    %112 = vector.broadcast %111 : vector<2x1x128xf32> to vector<2x16x128xf32>
    %113 = arith.mulf %109, %112 : vector<2x16x128xf32>
    %114 = arith.addf %108, %113 : vector<2x16x128xf32>
    %c0_35 = arith.constant 0 : index
    %c0_36 = arith.constant 0 : index
    %c0_37 = arith.constant 0 : index
    %115 = vector.load %arg8[%c0_35, %c0_36, %c0_37] : memref<2x16x128xf32, #tpu.memory_space<vmem>>, vector<2x16x128xf32>
    tpu.vector_store %arg8[%c0_35, %c0_36, %c0_37], %114 {strides = array<i32>} : memref<2x16x128xf32, #tpu.memory_space<vmem>>, vector<2x16x128xf32>,
    return
  }
  func.func @transform_0(%arg0: i32) -> (i32, i32, i32) {
    %c0_i32 = arith.constant 0 : i32
    %c0_i32_0 = arith.constant 0 : i32
    %c0_i32_1 = arith.constant 0 : i32
    %c0_i32_2 = arith.constant 0 : i32
    return %c0_i32, %c0_i32_0, %c0_i32_1 : i32, i32, i32
  }
  func.func @transform_1(%arg0: i32) -> (i32, i32, i32) {
    %c0_i32 = arith.constant 0 : i32
    %c0_i32_0 = arith.constant 0 : i32
    %c0_i32_1 = arith.constant 0 : i32
    %c0_i32_2 = arith.constant 0 : i32
    return %c0_i32, %c0_i32_0, %c0_i32_1 : i32, i32, i32
  }
  func.func @transform_2(%arg0: i32) -> (i32, i32) {
    %c0_i32 = arith.constant 0 : i32
    %c0_i32_0 = arith.constant 0 : i32
    %c0_i32_1 = arith.constant 0 : i32
    return %c0_i32, %c0_i32_0 : i32, i32
  }
  func.func @transform_3(%arg0: i32) -> (i32, i32) {
    %c0_i32 = arith.constant 0 : i32
    %c0_i32_0 = arith.constant 0 : i32
    %c0_i32_1 = arith.constant 0 : i32
    return %c0_i32, %c0_i32_0 : i32, i32
  }
  func.func @transform_4(%arg0: i32) -> (i32, i32) {
    %c0_i32 = arith.constant 0 : i32
    %c0_i32_0 = arith.constant 0 : i32
    %c0_i32_1 = arith.constant 0 : i32
    return %c0_i32, %c0_i32_0 : i32, i32
  }
  func.func @transform_5(%arg0: i32) -> (i32, i32) {
    %c0_i32 = arith.constant 0 : i32
    %c0_i32_0 = arith.constant 0 : i32
    %c0_i32_1 = arith.constant 0 : i32
    return %c0_i32, %c0_i32_0 : i32, i32
  }
  func.func @transform_6(%arg0: i32) -> (i32, i32) {
    %c0_i32 = arith.constant 0 : i32
    %c0_i32_0 = arith.constant 0 : i32
    %c0_i32_1 = arith.constant 0 : i32
    return %c0_i32, %c0_i32_0 : i32, i32
  }
  func.func @transform_7(%arg0: i32) -> (i32, i32, i32) {
    %c0_i32 = arith.constant 0 : i32
    %c0_i32_0 = arith.constant 0 : i32
    %c0_i32_1 = arith.constant 0 : i32
    %c0_i32_2 = arith.constant 0 : i32
    return %c0_i32, %c0_i32_0, %c0_i32_1 : i32, i32, i32
  }
}

</mosaic_0001>

<llo_original>
// kernel: tpu_custom_call.1
$region0: #{tpu_custom_call.1}
  #allocation0 [shape = 'u32[]', space=smem, size = 0x4, offset = 0x4, fixed_abs, tag = 'smem constant byte address 0x4 - core index']
  #allocation1 [shape = 'u32[144,128]{1,0:T(1,128)}', space=vmem, size = 0x12000, scoped, tag = 'internal scratch']
  %s0 = inlined_call_operand.vmem [shape: f32[2,16,128], index: 0, kind: input, shape index: {}]
  %s1 = inlined_call_operand.hbm [shape: bf16[2,384,128], index: 1, kind: input, shape index: {}]
  %s2 = inlined_call_operand.vmem [shape: f32[2,128], index: 2, kind: input, shape index: {}]
  %s3 = inlined_call_operand.vmem [shape: bf16[128,8], index: 3, kind: input, shape index: {}]
  %s4 = inlined_call_operand.vmem [shape: f32[1,8], index: 4, kind: input, shape index: {}]
  %s5 = inlined_call_operand.vmem [shape: f32[1,8], index: 5, kind: input, shape index: {}]
  %s6 = inlined_call_operand.vmem [shape: bf16[8,256], index: 6, kind: input, shape index: {}]
  %s7 = inlined_call_operand.hbm [shape: f32[2,16,128], index: 7, kind: output, shape index: {}]
  %s8 = sld [smem:[#allocation0]]
  $region42: #{tpu_custom_call.1} parent=0
    _
  %s10 = ssub.s32 1, %s8
  %s11 = scalar_select 0, %s10, %s8
  $region1: #{tpu_custom_call.1} parent=0
    #allocation2 [shape = 'u8[196608]{0}', space=vmem, size = 0x30000, scoped, tag = 'input window, operand 1, single buffered']
    #allocation3 [shape = 's32[1]{0}', space=sflag, size = 0x4, scoped, tag = 'scoped memory for tpu_custom_call.1']
    #allocation4 [shape = 's32[1]{0}', space=sflag, size = 0x4, scoped, tag = 'scoped memory for tpu_custom_call.1']
    #allocation5 [shape = 'u8[16384]{0}', space=vmem, size = 0x4000, scoped, tag = 'output window, operand 0, single buffered']
    %12 = vsyncpa [#allocation3], 0
    %13 = vsyncpa [#allocation4], 0
    // Predicated region
    $region2: #{tpu_custom_call.1} parent=1 // pred_check
      _
    $region3: #{tpu_custom_call.1} parent=1 // pred_check_branch
      %15 = sbr.rel (0) target = $region5
    $region4: #{tpu_custom_call.1} parent=1 // pred_region
      _
    $region5: #{tpu_custom_call.1} parent=1 // pred_fallthru
      _
    // Predicated region
    $region6: #{tpu_custom_call.1} parent=1 // pred_check
      _
    $region7: #{tpu_custom_call.1} parent=1 // pred_check_branch
      %17 = sbr.rel (0) target = $region9
    $region8: #{tpu_custom_call.1} parent=1 // pred_region
      %s19 = ssub.s32 6144, 6144
      %20 = vsyncadd [#allocation3], %s19
      %s21 = sshll.u32 [#allocation2], 4
      %s22 = int_to_ptr.vmem [resolvable:$true] %s21
      %27 = dma.hbm_to_vmem [thread:$0]  %s1, 6144, %s22, [#allocation3], 64, 64, 4
    $region9: #{tpu_custom_call.1} parent=1 // pred_fallthru
      _
    // Predicated region
    $region10: #{tpu_custom_call.1} parent=1 // pred_check
      _
    $region11: #{tpu_custom_call.1} parent=1 // pred_check_branch
      %29 = sbr.rel (0) target = $region13
    $region12: #{tpu_custom_call.1} parent=1 // pred_region
      _
    $region13: #{tpu_custom_call.1} parent=1 // pred_fallthru
      _
    // Predicated region
    $region14: #{tpu_custom_call.1} parent=1 // pred_check
      _
    $region15: #{tpu_custom_call.1} parent=1 // pred_check_branch
      %31 = sbr.rel (0) target = $region17
    $region16: #{tpu_custom_call.1} parent=1 // pred_region
      _
    $region17: #{tpu_custom_call.1} parent=1 // pred_fallthru
      _
    // Predicated region
    $region18: #{tpu_custom_call.1} parent=1 // pred_check
      _
    $region19: #{tpu_custom_call.1} parent=1 // pred_check_branch
      %33 = sbr.rel (0) target = $region21
    $region20: #{tpu_custom_call.1} parent=1 // pred_region
      _
    $region21: #{tpu_custom_call.1} parent=1 // pred_fallthru
      _
    // Predicated region
    $region22: #{tpu_custom_call.1} parent=1 // pred_check
      _
    $region23: #{tpu_custom_call.1} parent=1 // pred_check_branch
      %35 = sbr.rel (0) target = $region25
    $region24: #{tpu_custom_call.1} parent=1 // pred_region
      _
    $region25: #{tpu_custom_call.1} parent=1 // pred_fallthru
      _
    // Predicated region
    $region26: #{tpu_custom_call.1} parent=1 // pred_check
      _
    $region27: #{tpu_custom_call.1} parent=1 // pred_check_branch
      %37 = sbr.rel (0) target = $region29
    $region28: #{tpu_custom_call.1} parent=1 // pred_region
      _
    $region29: #{tpu_custom_call.1} parent=1 // pred_fallthru
      _
    // Predicated region
    $region30: #{tpu_custom_call.1} parent=1 // pred_check
      _
    $region31: #{tpu_custom_call.1} parent=1 // pred_check_branch
      %39 = sbr.rel (0) target = $region33
    $region32: #{tpu_custom_call.1} parent=1 // pred_region
      %40 = dma.done [#allocation3], 6144
    $region33: #{tpu_custom_call.1} parent=1 // pred_fallthru
      _
    %v42 = vld [vmem:[%s0] sm:$0xff]
    %v43 = vld [vmem:[%s0 + $0x8] sm:$0xff]
    %v44 = vld [vmem:[%s0 + $0x10] sm:$0xff]
    %v45 = vld [vmem:[%s0 + $0x18] sm:$0xff]
    %vm48 = vcmask 1041408
    %v49 = vrot.slane %v42, 6
    %v50 = vrot.slane %v43, 6
    %v51 = vsel %vm48, %v49, %v50
    %v54 = vsel %vm48, 0.0, %v49
    %v57 = vrot.slane %v44, 6
    %v58 = vrot.slane %v45, 6
    %v59 = vsel %vm48, %v57, %v58
    %v62 = vsel %vm48, 0.0, %v57
    %v63 = vpack.c.bf16 %v51, %v54
    %v64 = vpack.c.bf16 %v59, %v62
    %vm65 = vcmask 1040384
    %v66 = vrot.slane %v42, 7
    %v67 = vrot.slane %v43, 7
    %v68 = vsel %vm65, %v66, %v67
    %v71 = vsel %vm65, 0.0, %v66
    %v72 = vrot.slane %v44, 7
    %v73 = vrot.slane %v45, 7
    %v74 = vsel %vm65, %v72, %v73
    %v77 = vsel %vm65, 0.0, %v72
    %v78 = vpack.c.bf16 %v68, %v71
    %v79 = vpack.c.bf16 %v74, %v77
    %v80 = vpack.c.bf16 %v43, %v42
    %v81 = vpack.c.bf16 %v45, %v44
    %vm82 = vcmask 1046528
    %v83 = vrot.slane %v42, 1
    %v84 = vrot.slane %v43, 1
    %v85 = vsel %vm82, %v83, %v84
    %v88 = vsel %vm82, %v84, 0.0
    %v89 = vrot.slane %v44, 1
    %v90 = vrot.slane %v45, 1
    %v91 = vsel %vm82, %v89, %v90
    %v94 = vsel %vm82, %v90, 0.0
    %v95 = vpack.c.bf16 %v88, %v85
    %v96 = vpack.c.bf16 %v94, %v91
    %vm97 = vcmask 1045504
    %v98 = vrot.slane %v42, 2
    %v99 = vrot.slane %v43, 2
    %v100 = vsel %vm97, %v98, %v99
    %v103 = vsel %vm97, %v99, 0.0
    %v104 = vrot.slane %v44, 2
    %v105 = vrot.slane %v45, 2
    %v106 = vsel %vm97, %v104, %v105
    %v109 = vsel %vm97, %v105, 0.0
    %v110 = vpack.c.bf16 %v103, %v100
    %v111 = vpack.c.bf16 %v109, %v106
    %v112 = vld [vmem:[#allocation2] sm:$0xf]
    %v113 = vld [vmem:[#allocation2 + $0x4] sm:$0xf]
    %v114 = vld [vmem:[#allocation2 + $0x8] sm:$0xf]
    %v115 = vld [vmem:[#allocation2 + $0xc] sm:$0xf]
    %v116 = vld [vmem:[#allocation2 + $0x10] sm:$0xf]
    %v117 = vld [vmem:[#allocation2 + $0x14] sm:$0xf]
    %v118 = vld [vmem:[#allocation2 + $0x18] sm:$0xf]
    %v119 = vld [vmem:[#allocation2 + $0x1c] sm:$0xf]
    %v120 = vld [vmem:[#allocation2 + $0x20] sm:$0xf]
    %v121 = vld [vmem:[#allocation2 + $0x24] sm:$0xf]
    %v122 = vld [vmem:[#allocation2 + $0x28] sm:$0xf]
    %v123 = vld [vmem:[#allocation2 + $0x2c] sm:$0xf]
    %v124 = vld [vmem:[#allocation2 + $0x30] sm:$0xf]
    %v125 = vld [vmem:[#allocation2 + $0x34] sm:$0xf]
    %v126 = vld [vmem:[#allocation2 + $0x38] sm:$0xf]
    %v127 = vld [vmem:[#allocation2 + $0x3c] sm:$0xf]
    %v128 = vld [vmem:[#allocation2 + $0x40] sm:$0xf]
    %v129 = vld [vmem:[#allocation2 + $0x44] sm:$0xf]
    %v130 = vld [vmem:[#allocation2 + $0x48] sm:$0xf]
    %v131 = vld [vmem:[#allocation2 + $0x4c] sm:$0xf]
    %v132 = vld [vmem:[#allocation2 + $0x50] sm:$0xf]
    %v133 = vld [vmem:[#allocation2 + $0x54] sm:$0xf]
    %v134 = vld [vmem:[#allocation2 + $0x58] sm:$0xf]
    %v135 = vld [vmem:[#allocation2 + $0x5c] sm:$0xf]
    %v136 = vld [vmem:[#allocation2 + $0x60] sm:$0xf]
    %v137 = vld [vmem:[#allocation2 + $0x64] sm:$0xf]
    %v138 = vld [vmem:[#allocation2 + $0x68] sm:$0xf]
    %v139 = vld [vmem:[#allocation2 + $0x6c] sm:$0xf]
    %v140 = vld [vmem:[#allocation2 + $0x70] sm:$0xf]
    %v141 = vld [vmem:[#allocation2 + $0x74] sm:$0xf]
    %v142 = vld [vmem:[#allocation2 + $0x78] sm:$0xf]
    %v143 = vld [vmem:[#allocation2 + $0x7c] sm:$0xf]
    %v144 = vld [vmem:[#allocation2 + $0x80] sm:$0xf]
    %v145 = vld [vmem:[#allocation2 + $0x84] sm:$0xf]
    %v146 = vld [vmem:[#allocation2 + $0x88] sm:$0xf]
    %v147 = vld [vmem:[#allocation2 + $0x8c] sm:$0xf]
    %v148 = vld [vmem:[#allocation2 + $0x90] sm:$0xf]
    %v149 = vld [vmem:[#allocation2 + $0x94] sm:$0xf]
    %v150 = vld [vmem:[#allocation2 + $0x98] sm:$0xf]
    %v151 = vld [vmem:[#allocation2 + $0x9c] sm:$0xf]
    %v152 = vld [vmem:[#allocation2 + $0xa0] sm:$0xf]
    %v153 = vld [vmem:[#allocation2 + $0xa4] sm:$0xf]
    %v154 = vld [vmem:[#allocation2 + $0xa8] sm:$0xf]
    %v155 = vld [vmem:[#allocation2 + $0xac] sm:$0xf]
    %v156 = vld [vmem:[#allocation2 + $0xb0] sm:$0xf]
    %v157 = vld [vmem:[#allocation2 + $0xb4] sm:$0xf]
    %v158 = vld [vmem:[#allocation2 + $0xb8] sm:$0xf]
    %v159 = vld [vmem:[#allocation2 + $0xbc] sm:$0xf]
    %v160 = vld [vmem:[%s2] sm:$0x1]
    %v161 = vlaneseq
    %v162 = vshrl.u32 %v161, 7
    %v163 = vsub.s32 0, %v162
    %v164 = vrot.slane %v160, %v163
    %v213 = vunpack.c.l.b16 %v112
    %v214 = vunpack.c.l.b16 %v113
    %v215 = vunpack.c.l.b16 %v114
    %v216 = vunpack.c.l.b16 %v115
    %v217 = vunpack.c.l.b16 %v116
    %v218 = vunpack.c.l.b16 %v117
    %v219 = vunpack.c.l.b16 %v118
    %v220 = vunpack.c.l.b16 %v119
    %v221 = vunpack.c.l.b16 %v120
    %v222 = vunpack.c.l.b16 %v121
    %v223 = vunpack.c.l.b16 %v122
    %v224 = vunpack.c.l.b16 %v123
    %v225 = vunpack.c.l.b16 %v124
    %v226 = vunpack.c.l.b16 %v125
    %v227 = vunpack.c.l.b16 %v126
    %v228 = vunpack.c.l.b16 %v127
    %v229 = vunpack.c.l.b16 %v128
    %v230 = vunpack.c.l.b16 %v129
    %v231 = vunpack.c.l.b16 %v130
    %v232 = vunpack.c.l.b16 %v131
    %v233 = vunpack.c.l.b16 %v132
    %v234 = vunpack.c.l.b16 %v133
    %v235 = vunpack.c.l.b16 %v134
    %v236 = vunpack.c.l.b16 %v135
    %v237 = vunpack.c.l.b16 %v136
    %v238 = vunpack.c.l.b16 %v137
    %v239 = vunpack.c.l.b16 %v138
    %v240 = vunpack.c.l.b16 %v139
    %v241 = vunpack.c.l.b16 %v140
    %v242 = vunpack.c.l.b16 %v141
    %v243 = vunpack.c.l.b16 %v142
    %v244 = vunpack.c.l.b16 %v143
    %v245 = vunpack.c.l.b16 %v144
    %v246 = vunpack.c.l.b16 %v145
    %v247 = vunpack.c.l.b16 %v146
    %v248 = vunpack.c.l.b16 %v147
    %v249 = vunpack.c.l.b16 %v148
    %v250 = vunpack.c.l.b16 %v149
    %v251 = vunpack.c.l.b16 %v150
    %v252 = vunpack.c.l.b16 %v151
    %v253 = vunpack.c.l.b16 %v152
    %v254 = vunpack.c.l.b16 %v153
    %v255 = vunpack.c.l.b16 %v154
    %v256 = vunpack.c.l.b16 %v155
    %v257 = vunpack.c.l.b16 %v156
    %v258 = vunpack.c.l.b16 %v157
    %v259 = vunpack.c.l.b16 %v158
    %v260 = vunpack.c.l.b16 %v159
    %v261 = vpack.c.b16 %v214, %v213
    %v262 = vpack.c.b16 %v216, %v215
    %v263 = vpack.c.b16 %v218, %v217
    %v264 = vpack.c.b16 %v220, %v219
    %v265 = vpack.c.b16 %v222, %v221
    %v266 = vpack.c.b16 %v224, %v223
    %v267 = vpack.c.b16 %v226, %v225
    %v268 = vpack.c.b16 %v228, %v227
    %v269 = vpack.c.b16 %v230, %v229
    %v270 = vpack.c.b16 %v232, %v231
    %v271 = vpack.c.b16 %v234, %v233
    %v272 = vpack.c.b16 %v236, %v235
    %v273 = vpack.c.b16 %v238, %v237
    %v274 = vpack.c.b16 %v240, %v239
    %v275 = vpack.c.b16 %v242, %v241
    %v276 = vpack.c.b16 %v244, %v243
    %v277 = vpack.c.b16 %v246, %v245
    %v278 = vpack.c.b16 %v248, %v247
    %v279 = vpack.c.b16 %v250, %v249
    %v280 = vpack.c.b16 %v252, %v251
    %v281 = vpack.c.b16 %v254, %v253
    %v282 = vpack.c.b16 %v256, %v255
    %v283 = vpack.c.b16 %v258, %v257
    %v284 = vpack.c.b16 %v260, %v259
    %309 = vmatprep.subr.bf16.mxu0 0
    %310 = vmatpush1.bf16.msra.mxu0 %v261
    %311 = vmatprep.subr.bf16.mxu0 0
    %312 = vmatpush1.bf16.msra.mxu0 %v262
    %313 = vmatprep.subr.bf16.mxu0 0
    %314 = vmatpush1.bf16.msra.mxu0 %v263
    %315 = vmatprep.subr.bf16.mxu0 0
    %316 = vmatpush1.bf16.msra.mxu0 %v264
    %317 = vmatprep.subr.bf16.mxu0 0
    %318 = vmatpush1.bf16.msra.mxu0 %v265
    %319 = vmatprep.subr.bf16.mxu0 0
    %320 = vmatpush1.bf16.msra.mxu0 %v266
    %321 = vmatprep.subr.bf16.mxu0 0
    %322 = vmatpush1.bf16.msra.mxu0 %v267
    %323 = vmatprep.subr.bf16.mxu0 0
    %324 = vmatpush1.bf16.msra.mxu0 %v268
    %325 = vmatprep.subr.bf16.mxu0 0
    %326 = vmatpush1.bf16.msra.mxu0 %v269
    %327 = vmatprep.subr.bf16.mxu0 0
    %328 = vmatpush1.bf16.msra.mxu0 %v270
    %329 = vmatprep.subr.bf16.mxu0 0
    %330 = vmatpush1.bf16.msra.mxu0 %v271
    %331 = vmatprep.subr.bf16.mxu0 0
    %332 = vmatpush1.bf16.msra.mxu0 %v272
    %333 = vmatprep.subr.bf16.mxu0 0
    %334 = vmatpush1.bf16.msra.mxu0 %v273
    %335 = vmatprep.subr.bf16.mxu0 0
    %336 = vmatpush1.bf16.msra.mxu0 %v274
    %337 = vmatprep.subr.bf16.mxu0 0
    %338 = vmatpush1.bf16.msra.mxu0 %v275
    %339 = vmatprep.subr.bf16.mxu0 0
    %340 = vmatpush1.bf16.msra.mxu0 %v276
    %341 = vmatprep.mubr.bf16.mxu0 %v80
    %342 = vmatmul.mubr.bf16.gmra.mrb[0].mxu0 %v78
    %v343 = vpop.f32.mrb[0].mxu0
    %v344 = vadd.f32 %v164, %v343
    %v345 = vpop.f32.mrb[0].mxu0
    %v346 = vpop.f32.mrb[0].mxu0
    %v347 = vadd.f32 %v164, %v346
    %v348 = vpop.f32.mrb[0].mxu0
    %349 = vmatprep.mubr.bf16.mxu0 %v81
    %350 = vmatmul.mubr.bf16.gmra.mrb[0].mxu0 %v79
    %v351 = vpop.f32.mrb[0].mxu0
    %v352 = vadd.f32 %v164, %v351
    %v353 = vpop.f32.mrb[0].mxu0
    %v354 = vpop.f32.mrb[0].mxu0
    %v355 = vadd.f32 %v164, %v354
    %v356 = vpop.f32.mrb[0].mxu0
    %357 = vdwg.mxu0
    %358 = vmatprep.subr.bf16.mxu0 0
    %359 = vmatpush1.bf16.msra.mxu0 %v277
    %360 = vmatprep.subr.bf16.mxu0 0
    %361 = vmatpush1.bf16.msra.mxu0 %v278
    %362 = vmatprep.subr.bf16.mxu0 0
    %363 = vmatpush1.bf16.msra.mxu0 %v279
    %364 = vmatprep.subr.bf16.mxu0 0
    %365 = vmatpush1.bf16.msra.mxu0 %v280
    %366 = vmatprep.subr.bf16.mxu0 0
    %367 = vmatpush1.bf16.msra.mxu0 %v281
    %368 = vmatprep.subr.bf16.mxu0 0
    %369 = vmatpush1.bf16.msra.mxu0 %v282
    %370 = vmatprep.subr.bf16.mxu0 0
    %371 = vmatpush1.bf16.msra.mxu0 %v283
    %372 = vmatprep.subr.bf16.mxu0 0
    %373 = vmatpush1.bf16.msra.mxu0 %v284
    %374 = vmatprep.subr.bf16.mxu0 0
    %375 = vmatpush1.bf16.msra.mxu0 0
    %376 = vmatprep.subr.bf16.mxu0 0
    %377 = vmatpush1.bf16.msra.mxu0 0
    %378 = vmatprep.subr.bf16.mxu0 0
    %379 = vmatpush1.bf16.msra.mxu0 0
    %380 = vmatprep.subr.bf16.mxu0 0
    %381 = vmatpush1.bf16.msra.mxu0 0
    %382 = vmatprep.subr.bf16.mxu0 0
    %383 = vmatpush1.bf16.msra.mxu0 0
    %384 = vmatprep.subr.bf16.mxu0 0
    %385 = vmatpush1.bf16.msra.mxu0 0
    %386 = vmatprep.subr.bf16.mxu0 0
    %387 = vmatpush1.bf16.msra.mxu0 0
    %388 = vmatprep.subr.bf16.mxu0 0
    %389 = vmatpush1.bf16.msra.mxu0 0
    %390 = vmatprep.mubr.bf16.mxu0 0
    %391 = vmatmul.mubr.bf16.gmra.mrb[0].mxu0 %v95
    %v392 = vpop.f32.mrb[0].mxu0
    %v393 = vadd.f32 %v344, %v392
    %v394 = vpop.f32.mrb[0].mxu0
    %v395 = vpop.f32.mrb[0].mxu0
    %v396 = vadd.f32 %v347, %v395
    %v397 = vpop.f32.mrb[0].mxu0
    %398 = vmatprep.mubr.bf16.mxu0 0
    %399 = vmatmul.mubr.bf16.gmra.mrb[0].mxu0 %v96
    %v400 = vpop.f32.mrb[0].mxu0
    %v401 = vadd.f32 %v352, %v400
    %v402 = vpop.f32.mrb[0].mxu0
    %v403 = vpop.f32.mrb[0].mxu0
    %v404 = vadd.f32 %v355, %v403
    %v405 = vpop.f32.mrb[0].mxu0
    %406 = vdwg.mxu0
    %v407 = vmax.f32 %v393, 0.0
    %v408 = vmax.f32 %v396, 0.0
    %v409 = vmax.f32 %v401, 0.0
    %v410 = vmax.f32 %v404, 0.0
    %s411 = scalar_lea.vmem [#allocation2], 192
    %v412 = vld [vmem:[%s411] sm:$0xf]
    %v413 = vld [vmem:[%s411 + $0x4] sm:$0xf]
    %v414 = vld [vmem:[%s411 + $0x8] sm:$0xf]
    %v415 = vld [vmem:[%s411 + $0xc] sm:$0xf]
    %v416 = vld [vmem:[%s411 + $0x10] sm:$0xf]
    %v417 = vld [vmem:[%s411 + $0x14] sm:$0xf]
    %v418 = vld [vmem:[%s411 + $0x18] sm:$0xf]
    %v419 = vld [vmem:[%s411 + $0x1c] sm:$0xf]
    %v420 = vld [vmem:[%s411 + $0x20] sm:$0xf]
    %v421 = vld [vmem:[%s411 + $0x24] sm:$0xf]
    %v422 = vld [vmem:[%s411 + $0x28] sm:$0xf]
    %v423 = vld [vmem:[%s411 + $0x2c] sm:$0xf]
    %v424 = vld [vmem:[%s411 + $0x30] sm:$0xf]
    %v425 = vld [vmem:[%s411 + $0x34] sm:$0xf]
    %v426 = vld [vmem:[%s411 + $0x38] sm:$0xf]
    %v427 = vld [vmem:[%s411 + $0x3c] sm:$0xf]
    %v428 = vld [vmem:[%s411 + $0x40] sm:$0xf]
    %v429 = vld [vmem:[%s411 + $0x44] sm:$0xf]
    %v430 = vld [vmem:[%s411 + $0x48] sm:$0xf]
    %v431 = vld [vmem:[%s411 + $0x4c] sm:$0xf]
    %v432 = vld [vmem:[%s411 + $0x50] sm:$0xf]
    %v433 = vld [vmem:[%s411 + $0x54] sm:$0xf]
    %v434 = vld [vmem:[%s411 + $0x58] sm:$0xf]
    %v435 = vld [vmem:[%s411 + $0x5c] sm:$0xf]
    %v436 = vld [vmem:[%s411 + $0x60] sm:$0xf]
    %v437 = vld [vmem:[%s411 + $0x64] sm:$0xf]
    %v438 = vld [vmem:[%s411 + $0x68] sm:$0xf]
    %v439 = vld [vmem:[%s411 + $0x6c] sm:$0xf]
    %v440 = vld [vmem:[%s411 + $0x70] sm:$0xf]
    %v441 = vld [vmem:[%s411 + $0x74] sm:$0xf]
    %v442 = vld [vmem:[%s411 + $0x78] sm:$0xf]
    %v443 = vld [vmem:[%s411 + $0x7c] sm:$0xf]
    %v444 = vld [vmem:[%s411 + $0x80] sm:$0xf]
    %v445 = vld [vmem:[%s411 + $0x84] sm:$0xf]
    %v446 = vld [vmem:[%s411 + $0x88] sm:$0xf]
    %v447 = vld [vmem:[%s411 + $0x8c] sm:$0xf]
    %v448 = vld [vmem:[%s411 + $0x90] sm:$0xf]
    %v449 = vld [vmem:[%s411 + $0x94] sm:$0xf]
    %v450 = vld [vmem:[%s411 + $0x98] sm:$0xf]
    %v451 = vld [vmem:[%s411 + $0x9c] sm:$0xf]
    %v452 = vld [vmem:[%s411 + $0xa0] sm:$0xf]
    %v453 = vld [vmem:[%s411 + $0xa4] sm:$0xf]
    %v454 = vld [vmem:[%s411 + $0xa8] sm:$0xf]
    %v455 = vld [vmem:[%s411 + $0xac] sm:$0xf]
    %v456 = vld [vmem:[%s411 + $0xb0] sm:$0xf]
    %v457 = vld [vmem:[%s411 + $0xb4] sm:$0xf]
    %v458 = vld [vmem:[%s411 + $0xb8] sm:$0xf]
    %v459 = vld [vmem:[%s411 + $0xbc] sm:$0xf]
    %v460 = vld [vmem:[%s2 + $0x1] sm:$0x1]
    %v461 = vlaneseq
    %v462 = vshrl.u32 %v461, 7
    %v463 = vsub.s32 0, %v462
    %v464 = vrot.slane %v460, %v463
    %v513 = vunpack.c.l.b16 %v412
    %v514 = vunpack.c.l.b16 %v413
    %v515 = vunpack.c.l.b16 %v414
    %v516 = vunpack.c.l.b16 %v415
    %v517 = vunpack.c.l.b16 %v416
    %v518 = vunpack.c.l.b16 %v417
    %v519 = vunpack.c.l.b16 %v418
    %v520 = vunpack.c.l.b16 %v419
    %v521 = vunpack.c.l.b16 %v420
    %v522 = vunpack.c.l.b16 %v421
    %v523 = vunpack.c.l.b16 %v422
    %v524 = vunpack.c.l.b16 %v423
    %v525 = vunpack.c.l.b16 %v424
    %v526 = vunpack.c.l.b16 %v425
    %v527 = vunpack.c.l.b16 %v426
    %v528 = vunpack.c.l.b16 %v427
    %v529 = vunpack.c.l.b16 %v428
    %v530 = vunpack.c.l.b16 %v429
    %v531 = vunpack.c.l.b16 %v430
    %v532 = vunpack.c.l.b16 %v431
    %v533 = vunpack.c.l.b16 %v432
    %v534 = vunpack.c.l.b16 %v433
    %v535 = vunpack.c.l.b16 %v434
    %v536 = vunpack.c.l.b16 %v435
    %v537 = vunpack.c.l.b16 %v436
    %v538 = vunpack.c.l.b16 %v437
    %v539 = vunpack.c.l.b16 %v438
    %v540 = vunpack.c.l.b16 %v439
    %v541 = vunpack.c.l.b16 %v440
    %v542 = vunpack.c.l.b16 %v441
    %v543 = vunpack.c.l.b16 %v442
    %v544 = vunpack.c.l.b16 %v443
    %v545 = vunpack.c.l.b16 %v444
    %v546 = vunpack.c.l.b16 %v445
    %v547 = vunpack.c.l.b16 %v446
    %v548 = vunpack.c.l.b16 %v447
    %v549 = vunpack.c.l.b16 %v448
    %v550 = vunpack.c.l.b16 %v449
    %v551 = vunpack.c.l.b16 %v450
    %v552 = vunpack.c.l.b16 %v451
    %v553 = vunpack.c.l.b16 %v452
    %v554 = vunpack.c.l.b16 %v453
    %v555 = vunpack.c.l.b16 %v454
    %v556 = vunpack.c.l.b16 %v455
    %v557 = vunpack.c.l.b16 %v456
    %v558 = vunpack.c.l.b16 %v457
    %v559 = vunpack.c.l.b16 %v458
    %v560 = vunpack.c.l.b16 %v459
    %v561 = vpack.c.b16 %v514, %v513
    %v562 = vpack.c.b16 %v516, %v515
    %v563 = vpack.c.b16 %v518, %v517
    %v564 = vpack.c.b16 %v520, %v519
    %v565 = vpack.c.b16 %v522, %v521
    %v566 = vpack.c.b16 %v524, %v523
    %v567 = vpack.c.b16 %v526, %v525
    %v568 = vpack.c.b16 %v528, %v527
    %v569 = vpack.c.b16 %v530, %v529
    %v570 = vpack.c.b16 %v532, %v531
    %v571 = vpack.c.b16 %v534, %v533
    %v572 = vpack.c.b16 %v536, %v535
    %v573 = vpack.c.b16 %v538, %v537
    %v574 = vpack.c.b16 %v540, %v539
    %v575 = vpack.c.b16 %v542, %v541
    %v576 = vpack.c.b16 %v544, %v543
    %v577 = vpack.c.b16 %v546, %v545
    %v578 = vpack.c.b16 %v548, %v547
    %v579 = vpack.c.b16 %v550, %v549
    %v580 = vpack.c.b16 %v552, %v551
    %v581 = vpack.c.b16 %v554, %v553
    %v582 = vpack.c.b16 %v556, %v555
    %v583 = vpack.c.b16 %v558, %v557
    %v584 = vpack.c.b16 %v560, %v559
    %609 = vmatprep.subr.bf16.mxu0 0
    %610 = vmatpush1.bf16.msra.mxu0 %v561
    %611 = vmatprep.subr.bf16.mxu0 0
    %612 = vmatpush1.bf16.msra.mxu0 %v562
    %613 = vmatprep.subr.bf16.mxu0 0
    %614 = vmatpush1.bf16.msra.mxu0 %v563
    %615 = vmatprep.subr.bf16.mxu0 0
    %616 = vmatpush1.bf16.msra.mxu0 %v564
    %617 = vmatprep.subr.bf16.mxu0 0
    %618 = vmatpush1.bf16.msra.mxu0 %v565
    %619 = vmatprep.subr.bf16.mxu0 0
    %620 = vmatpush1.bf16.msra.mxu0 %v566
    %621 = vmatprep.subr.bf16.mxu0 0
    %622 = vmatpush1.bf16.msra.mxu0 %v567
    %623 = vmatprep.subr.bf16.mxu0 0
    %624 = vmatpush1.bf16.msra.mxu0 %v568
    %625 = vmatprep.subr.bf16.mxu0 0
    %626 = vmatpush1.bf16.msra.mxu0 %v569
    %627 = vmatprep.subr.bf16.mxu0 0
    %628 = vmatpush1.bf16.msra.mxu0 %v570
    %629 = vmatprep.subr.bf16.mxu0 0
    %630 = vmatpush1.bf16.msra.mxu0 %v571
    %631 = vmatprep.subr.bf16.mxu0 0
    %632 = vmatpush1.bf16.msra.mxu0 %v572
    %633 = vmatprep.subr.bf16.mxu0 0
    %634 = vmatpush1.bf16.msra.mxu0 %v573
    %635 = vmatprep.subr.bf16.mxu0 0
    %636 = vmatpush1.bf16.msra.mxu0 %v574
    %637 = vmatprep.subr.bf16.mxu0 0
    %638 = vmatpush1.bf16.msra.mxu0 %v575
    %639 = vmatprep.subr.bf16.mxu0 0
    %640 = vmatpush1.bf16.msra.mxu0 %v576
    %641 = vmatprep.mubr.bf16.mxu0 %v80
    %642 = vmatmul.mubr.bf16.gmra.mrb[0].mxu0 %v63
    %v643 = vpop.f32.mrb[0].mxu0
    %v644 = vadd.f32 %v464, %v643
    %v645 = vpop.f32.mrb[0].mxu0
    %v646 = vpop.f32.mrb[0].mxu0
    %v647 = vadd.f32 %v464, %v646
    %v648 = vpop.f32.mrb[0].mxu0
    %649 = vmatprep.mubr.bf16.mxu0 %v81
    %650 = vmatmul.mubr.bf16.gmra.mrb[0].mxu0 %v64
    %v651 = vpop.f32.mrb[0].mxu0
    %v652 = vadd.f32 %v464, %v651
    %v653 = vpop.f32.mrb[0].mxu0
    %v654 = vpop.f32.mrb[0].mxu0
    %v655 = vadd.f32 %v464, %v654
    %v656 = vpop.f32.mrb[0].mxu0
    %657 = vdwg.mxu0
    %658 = vmatprep.subr.bf16.mxu0 0
    %659 = vmatpush1.bf16.msra.mxu0 %v577
    %660 = vmatprep.subr.bf16.mxu0 0
    %661 = vmatpush1.bf16.msra.mxu0 %v578
    %662 = vmatprep.subr.bf16.mxu0 0
    %663 = vmatpush1.bf16.msra.mxu0 %v579
    %664 = vmatprep.subr.bf16.mxu0 0
    %665 = vmatpush1.bf16.msra.mxu0 %v580
    %666 = vmatprep.subr.bf16.mxu0 0
    %667 = vmatpush1.bf16.msra.mxu0 %v581
    %668 = vmatprep.subr.bf16.mxu0 0
    %669 = vmatpush1.bf16.msra.mxu0 %v582
    %670 = vmatprep.subr.bf16.mxu0 0
    %671 = vmatpush1.bf16.msra.mxu0 %v583
    %672 = vmatprep.subr.bf16.mxu0 0
    %673 = vmatpush1.bf16.msra.mxu0 %v584
    %674 = vmatprep.subr.bf16.mxu0 0
    %675 = vmatpush1.bf16.msra.mxu0 0
    %676 = vmatprep.subr.bf16.mxu0 0
    %677 = vmatpush1.bf16.msra.mxu0 0
    %678 = vmatprep.subr.bf16.mxu0 0
    %679 = vmatpush1.bf16.msra.mxu0 0
    %680 = vmatprep.subr.bf16.mxu0 0
    %681 = vmatpush1.bf16.msra.mxu0 0
    %682 = vmatprep.subr.bf16.mxu0 0
    %683 = vmatpush1.bf16.msra.mxu0 0
    %684 = vmatprep.subr.bf16.mxu0 0
    %685 = vmatpush1.bf16.msra.mxu0 0
    %686 = vmatprep.subr.bf16.mxu0 0
    %687 = vmatpush1.bf16.msra.mxu0 0
    %688 = vmatprep.subr.bf16.mxu0 0
    %689 = vmatpush1.bf16.msra.mxu0 0
    %690 = vmatprep.mubr.bf16.mxu0 0
    %691 = vmatmul.mubr.bf16.gmra.mrb[0].mxu0 %v110
    %v692 = vpop.f32.mrb[0].mxu0
    %v693 = vadd.f32 %v644, %v692
    %v694 = vpop.f32.mrb[0].mxu0
    %v695 = vpop.f32.mrb[0].mxu0
    %v696 = vadd.f32 %v647, %v695
    %v697 = vpop.f32.mrb[0].mxu0
    %698 = vmatprep.mubr.bf16.mxu0 0
    %699 = vmatmul.mubr.bf16.gmra.mrb[0].mxu0 %v111
    %v700 = vpop.f32.mrb[0].mxu0
    %v701 = vadd.f32 %v652, %v700
    %v702 = vpop.f32.mrb[0].mxu0
    %v703 = vpop.f32.mrb[0].mxu0
    %v704 = vadd.f32 %v655, %v703
    %v705 = vpop.f32.mrb[0].mxu0
    %706 = vdwg.mxu0
    %v707 = vmax.f32 %v693, 0.0
    %v708 = vmax.f32 %v696, 0.0
    %v709 = vmax.f32 %v701, 0.0
    %v710 = vmax.f32 %v704, 0.0
    %v711 = vadd.f32 %v407, %v707
    %v712 = vadd.f32 %v408, %v708
    %v713 = vadd.f32 %v409, %v709
    %v714 = vadd.f32 %v410, %v710
    %v715 = vadd.f32 %v711, %v712
    %v716 = vrot.slane %v715, 4
    %v717 = vadd.f32 %v715, %v716
    %v718 = vrot.slane %v717, 2
    %v719 = vadd.f32 %v717, %v718
    %v720 = vrot.slane %v719, 1
    %v721 = vadd.f32 %v719, %v720
    %v722 = vadd.f32 %v713, %v714
    %v723 = vrot.slane %v722, 4
    %v724 = vadd.f32 %v722, %v723
    %v725 = vrot.slane %v724, 2
    %v726 = vadd.f32 %v724, %v725
    %v727 = vrot.slane %v726, 1
    %v728 = vadd.f32 %v726, %v727
    %v729 = vsel %vm65, %v721, %v728
    %v730 = vpack.c.bf16 %v729, %v729
    %v731 = vld [vmem:[%s3] sm:$0xf]
    %v732 = vld [vmem:[%s3 + $0x4] sm:$0xf]
    %v733 = vld [vmem:[%s3 + $0x8] sm:$0xf]
    %v734 = vld [vmem:[%s3 + $0xc] sm:$0xf]
    %v735 = vld [vmem:[%s3 + $0x10] sm:$0xf]
    %v736 = vld [vmem:[%s3 + $0x14] sm:$0xf]
    %v737 = vld [vmem:[%s3 + $0x18] sm:$0xf]
    %v738 = vld [vmem:[%s3 + $0x1c] sm:$0xf]
    %v739 = vld [vmem:[%s3 + $0x20] sm:$0xf]
    %v740 = vld [vmem:[%s3 + $0x24] sm:$0xf]
    %v741 = vld [vmem:[%s3 + $0x28] sm:$0xf]
    %v742 = vld [vmem:[%s3 + $0x2c] sm:$0xf]
    %v743 = vld [vmem:[%s3 + $0x30] sm:$0xf]
    %v744 = vld [vmem:[%s3 + $0x34] sm:$0xf]
    %v745 = vld [vmem:[%s3 + $0x38] sm:$0xf]
    %v746 = vld [vmem:[%s3 + $0x3c] sm:$0xf]
    %v763 = vunpack.c.l.b16 %v731
    %v764 = vunpack.c.l.b16 %v732
    %v765 = vunpack.c.l.b16 %v733
    %v766 = vunpack.c.l.b16 %v734
    %v767 = vunpack.c.l.b16 %v735
    %v768 = vunpack.c.l.b16 %v736
    %v769 = vunpack.c.l.b16 %v737
    %v770 = vunpack.c.l.b16 %v738
    %v771 = vunpack.c.l.b16 %v739
    %v772 = vunpack.c.l.b16 %v740
    %v773 = vunpack.c.l.b16 %v741
    %v774 = vunpack.c.l.b16 %v742
    %v775 = vunpack.c.l.b16 %v743
    %v776 = vunpack.c.l.b16 %v744
    %v777 = vunpack.c.l.b16 %v745
    %v778 = vunpack.c.l.b16 %v746
    %v779 = vpack.c.b16 %v764, %v763
    %v780 = vpack.c.b16 %v766, %v765
    %v781 = vpack.c.b16 %v768, %v767
    %v782 = vpack.c.b16 %v770, %v769
    %v783 = vpack.c.b16 %v772, %v771
    %v784 = vpack.c.b16 %v774, %v773
    %v785 = vpack.c.b16 %v776, %v775
    %v786 = vpack.c.b16 %v778, %v777
    %795 = vmatprep.subr.bf16.mxu0 0
    %796 = vmatpush1.bf16.msra.mxu0 %v779
    %797 = vmatprep.subr.bf16.mxu0 0
    %798 = vmatpush1.bf16.msra.mxu0 %v780
    %799 = vmatprep.subr.bf16.mxu0 0
    %800 = vmatpush1.bf16.msra.mxu0 %v781
    %801 = vmatprep.subr.bf16.mxu0 0
    %802 = vmatpush1.bf16.msra.mxu0 %v782
    %803 = vmatprep.subr.bf16.mxu0 0
    %804 = vmatpush1.bf16.msra.mxu0 %v783
    %805 = vmatprep.subr.bf16.mxu0 0
    %806 = vmatpush1.bf16.msra.mxu0 %v784
    %807 = vmatprep.subr.bf16.mxu0 0
    %808 = vmatpush1.bf16.msra.mxu0 %v785
    %809 = vmatprep.subr.bf16.mxu0 0
    %810 = vmatpush1.bf16.msra.mxu0 %v786
    %811 = vmatprep.subr.bf16.mxu0 0
    %812 = vmatpush1.bf16.msra.mxu0 0
    %813 = vmatprep.subr.bf16.mxu0 0
    %814 = vmatpush1.bf16.msra.mxu0 0
    %815 = vmatprep.subr.bf16.mxu0 0
    %816 = vmatpush1.bf16.msra.mxu0 0
    %817 = vmatprep.subr.bf16.mxu0 0
    %818 = vmatpush1.bf16.msra.mxu0 0
    %819 = vmatprep.subr.bf16.mxu0 0
    %820 = vmatpush1.bf16.msra.mxu0 0
    %821 = vmatprep.subr.bf16.mxu0 0
    %822 = vmatpush1.bf16.msra.mxu0 0
    %823 = vmatprep.subr.bf16.mxu0 0
    %824 = vmatpush1.bf16.msra.mxu0 0
    %825 = vmatprep.subr.bf16.mxu0 0
    %826 = vmatpush1.bf16.msra.mxu0 0
    %827 = vmatprep.mubr.bf16.mxu0 0
    %828 = vmatmul.mubr.bf16.gmra.mrb[0].mxu0 %v730
    %v829 = vpop.f32.mrb[0].mxu0
    %v830 = vadd.f32 0.0, %v829
    %v831 = vpop.f32.mrb[0].mxu0
    %v832 = vpop.f32.mrb[0].mxu0
    %v833 = vpop.f32.mrb[0].mxu0
    %834 = vdwg.mxu0
    %v835 = vld [vmem:[%s4] sm:$0x1]
    %v837 = vlaneseq
    %v838 = vshrl.u32 %v837, 7
    %v839 = vsub.s32 0, %v838
    %v840 = vrot.slane %v835, %v839
    %v842 = vmul.f32 %v830, %v840
    %v843 = vld [vmem:[%s5] sm:$0x1]
    %v845 = vlaneseq
    %v846 = vshrl.u32 %v845, 7
    %v847 = vsub.s32 0, %v846
    %v848 = vrot.slane %v843, %v847
    %v850 = vadd.f32 %v842, %v848
    %v851 = vmax.f32 %v850, 0.0
    %v852 = vpack.c.bf16 %v851, %v851
    %v853 = vld [vmem:[%s6] sm:$0xff]
    %v855 = vunpack.c.l.b16 %v853
    %v856 = vunpack.c.h.b16 %v853
    %v857 = vpack.c.b16 %v855, %v855
    %v858 = vpack.c.b16 %v856, %v856
    %vm859 = vcmask 64512
    %v861 = vsel %vm859, %v852, 0
    %vm863 = vcmask 1043456
    %v865 = vsel %vm863, %v857, 0
    %v868 = vsel %vm863, %v858, 0
    %870 = vmatprep.subr.bf16.mxu0 %v868
    %871 = vmatpush1.bf16.msra.mxu0 %v865
    %872 = vmatprep.subr.bf16.mxu0 0
    %873 = vmatpush1.bf16.msra.mxu0 0
    %874 = vmatprep.subr.bf16.mxu0 0
    %875 = vmatpush1.bf16.msra.mxu0 0
    %876 = vmatprep.subr.bf16.mxu0 0
    %877 = vmatpush1.bf16.msra.mxu0 0
    %878 = vmatprep.subr.bf16.mxu0 0
    %879 = vmatpush1.bf16.msra.mxu0 0
    %880 = vmatprep.subr.bf16.mxu0 0
    %881 = vmatpush1.bf16.msra.mxu0 0
    %882 = vmatprep.subr.bf16.mxu0 0
    %883 = vmatpush1.bf16.msra.mxu0 0
    %884 = vmatprep.subr.bf16.mxu0 0
    %885 = vmatpush1.bf16.msra.mxu0 0
    %886 = vmatprep.subr.bf16.mxu0 0
    %887 = vmatpush1.bf16.msra.mxu0 0
    %888 = vmatprep.subr.bf16.mxu0 0
    %889 = vmatpush1.bf16.msra.mxu0 0
    %890 = vmatprep.subr.bf16.mxu0 0
    %891 = vmatpush1.bf16.msra.mxu0 0
    %892 = vmatprep.subr.bf16.mxu0 0
    %893 = vmatpush1.bf16.msra.mxu0 0
    %894 = vmatprep.subr.bf16.mxu0 0
    %895 = vmatpush1.bf16.msra.mxu0 0
    %896 = vmatprep.subr.bf16.mxu0 0
    %897 = vmatpush1.bf16.msra.mxu0 0
    %898 = vmatprep.subr.bf16.mxu0 0
    %899 = vmatpush1.bf16.msra.mxu0 0
    %900 = vmatprep.subr.bf16.mxu0 0
    %901 = vmatpush1.bf16.msra.mxu0 0
    %902 = vmatprep.mubr.bf16.mxu0 0
    %903 = vmatmul.mubr.bf16.gmra.mrb[0].mxu0 %v861
    %v904 = vpop.f32.mrb[0].mxu0
    %v905 = vadd.f32 0.0, %v904
    %v906 = vpop.f32.mrb[0].mxu0
    %v907 = vadd.f32 0.0, %v906
    %v908 = vpop.f32.mrb[0].mxu0
    %v909 = vpop.f32.mrb[0].mxu0
    %910 = vdwg.mxu0
    %v911 = vmax.f32 %v905, %v907
    %v912 = vsub.f32 %v905, %v911
    %v913 = vmul.f32 %v912, 1.442695
    %v914 = vpow.pop %v913
    %v915 = vsub.f32 %v907, %v911
    %v916 = vmul.f32 %v915, 1.442695
    %v917 = vpow.pop %v916
    %v918 = vadd.f32 %v914, %v917
    %v919 = vrcp.pop %v918
    %v920 = vmul.f32 %v914, %v919
    %v923 = vunpack.c.l.s4 1966171168
    %v924 = vunpack.c.0.s8 %v923
    %v925 = vlaneseq
    %v926 = vshrl.u32 %v925, 7
    %v927 = vsub.s32 %v924, %v926
    %v928 = vrot.slane %v920, %v927
    %v929 = vcombine.high %v928, %v928
    %v931 = vunpack.c.l.s4 1966171168
    %v932 = vunpack.c.0.s8 %v931
    %v933 = vlaneseq
    %v934 = vshrl.u32 %v933, 7
    %v935 = vsub.s32 %v932, %v934
    %v936 = vrot.slane %v928, %v935
    %v938 = vunpack.c.l.s4 1966171168
    %v939 = vunpack.c.0.s8 %v938
    %v940 = vlaneseq
    %v941 = vshrl.u32 %v940, 7
    %v942 = vsub.s32 %v939, %v941
    %v943 = vrot.slane %v929, %v942
    %v944 = vlaneseq
    %v945 = vshrl.u32 %v944, 7
    %v946 = vsub.s32 0, %v945
    %v947 = vrot.slane %v936, %v946
    %v948 = vlaneseq
    %v949 = vshrl.u32 %v948, 7
    %v950 = vsub.s32 0, %v949
    %v951 = vrot.slane %v943, %v950
    %v954 = vmul.f32 %v407, %v947
    %v955 = vmul.f32 %v408, %v947
    %v956 = vmul.f32 %v409, %v951
    %v957 = vmul.f32 %v410, %v951
    %v958 = vmul.f32 %v917, %v919
    %v961 = vunpack.c.l.s4 1966171168
    %v962 = vunpack.c.0.s8 %v961
    %v963 = vlaneseq
    %v964 = vshrl.u32 %v963, 7
    %v965 = vsub.s32 %v962, %v964
    %v966 = vrot.slane %v958, %v965
    %v967 = vcombine.high %v966, %v966
    %v969 = vunpack.c.l.s4 1966171168
    %v970 = vunpack.c.0.s8 %v969
    %v971 = vlaneseq
    %v972 = vshrl.u32 %v971, 7
    %v973 = vsub.s32 %v970, %v972
    %v974 = vrot.slane %v966, %v973
    %v976 = vunpack.c.l.s4 1966171168
    %v977 = vunpack.c.0.s8 %v976
    %v978 = vlaneseq
    %v979 = vshrl.u32 %v978, 7
    %v980 = vsub.s32 %v977, %v979
    %v981 = vrot.slane %v967, %v980
    %v982 = vlaneseq
    %v983 = vshrl.u32 %v982, 7
    %v984 = vsub.s32 0, %v983
    %v985 = vrot.slane %v974, %v984
    %v986 = vlaneseq
    %v987 = vshrl.u32 %v986, 7
    %v988 = vsub.s32 0, %v987
    %v989 = vrot.slane %v981, %v988
    %v992 = vmul.f32 %v707, %v985
    %v993 = vmul.f32 %v708, %v985
    %v994 = vmul.f32 %v709, %v989
    %v995 = vmul.f32 %v710, %v989
    %v996 = vadd.f32 %v954, %v992
    %v997 = vadd.f32 %v955, %v993
    %v998 = vadd.f32 %v956, %v994
    %v999 = vadd.f32 %v957, %v995
    %1000 = vst [vmem:[#allocation5] sm:$0xff] %v996
    %1001 = vst [vmem:[#allocation5 + $0x8] sm:$0xff] %v997
    %1002 = vst [vmem:[#allocation5 + $0x10] sm:$0xff] %v998
    %1003 = vst [vmem:[#allocation5 + $0x18] sm:$0xff] %v999
    // Predicated region
    $region34: #{tpu_custom_call.1} parent=1 // pred_check
      _
    $region35: #{tpu_custom_call.1} parent=1 // pred_check_branch
      %1005 = sbr.rel (0) target = $region37
    $region36: #{tpu_custom_call.1} parent=1 // pred_region
      %s1007 = ssub.s32 512, 512
      %1008 = vsyncadd [#allocation4], %s1007
      %s1009 = sshll.u32 [#allocation5], 4
      %s1010 = int_to_ptr.vmem [resolvable:$true] %s1009
      %1015 = dma.vmem_to_hbm [thread:$0]  %s1010, 512, %s7, [#allocation4], 128, 128, 8
    $region37: #{tpu_custom_call.1} parent=1 // pred_fallthru
      _
    // Predicated region
    $region38: #{tpu_custom_call.1} parent=1 // pred_check
      _
    $region39: #{tpu_custom_call.1} parent=1 // pred_check_branch
      %1017 = sbr.rel (0) target = $region41
    $region40: #{tpu_custom_call.1} parent=1 // pred_region
      %1018 = dma.done [#allocation4], 512
    $region41: #{tpu_custom_call.1} parent=1 // pred_fallthru
      _
    %1019 = vsyncpa [#allocation3], 1
    %1020 = vsyncpa [#allocation4], 1

</llo_original>
